<compile_context>
chip_gen: v7x
topology: tpu7x:2x2x1
jax: 0.10.0
libtpu: 0.0.40
codegen_flags: <defaults>
</compile_context>

<pallas_src>
import functools

import jax
import jax.numpy as jnp
from jax import lax
from jax.experimental import pallas as pl
from jax.experimental.pallas import tpu as pltpu


N_BITS = 8
N_LEVELS = 2 ** N_BITS

_TARGET_TILE_BYTES = 2 * 1024 * 1024    # ~2 MiB per pipelined buffer
_MAX_LANES = 2048                       # cap for the column tile (two-pass)
_MAX_FUSED_CHUNKS = 16                  # static lane chunks in the fused kernel


# ----------------------------- budgets / tiles --------------------------------


def _round_up(a, b):
    return -(-a // b) * b


def _sublane_pack(dtype):
    """Rows per packed sublane group: 8 (f32), 16 (bf16/f16), 32 (int8/fp8)."""
    return max(8, 32 // jnp.dtype(dtype).itemsize)


@functools.lru_cache(maxsize=None)
def _vmem_budgets():
    """(tile_budget_bytes, vmem_limit_bytes), derived from the chip's VMEM.

    64 MiB parts (v7x) / unknown -> ~16 MiB budget, ~44 MiB scoped limit.
    128 MiB parts (v5e/v6e)      -> 48 MiB budget,  96 MiB scoped limit.
    """
    cap = 64 * 1024 * 1024
    try:
        info = pltpu.get_tpu_info()
        cap = int(getattr(info, "vmem_capacity_bytes", cap)) or cap
    except Exception:
        pass
    if cap >= 100 * 1024 * 1024:
        return 48 * 1024 * 1024, 96 * 1024 * 1024
    return cap // 4, (cap * 7) // 10


def _compiler_params(dim_sem):
    _, limit = _vmem_budgets()
    return pltpu.CompilerParams(dimension_semantics=dim_sem,
                                vmem_limit_bytes=int(limit))


def _fused_c_tile(c, d, dtype):
    """Channel tile for the fused one-pass kernel, or None if even a
    pack-row slab (in + out, double-buffered each) overflows the budget.
    The in-kernel f32 intermediates are chunk-bounded, so the input-dtype
    slab accounting below is accurate."""
    itemsize = jnp.dtype(dtype).itemsize
    pack = _sublane_pack(dtype)
    budget, _ = _vmem_budgets()
    per_row = 4 * d * itemsize            # in + out blocks, double-buffered
    max_rows = budget // per_row
    if max_rows < min(c, pack):
        return None
    target = _TARGET_TILE_BYTES // max(1, d * itemsize)
    rows = min(c, max_rows, max(pack, target))
    if rows >= c:
        # whole C fits in one target tile: split in two (megacore) when the
        # split stays sublane-aligned, else a single full-C block
        if c >= 2 * pack:
            return min(c, _round_up(pl.cdiv(c, 2), pack))
        return c
    return max(pack, (rows // pack) * pack)


def _fused_chunk(d):
    """Static lane-chunk width for the fused kernel (<= _MAX_FUSED_CHUNKS
    chunks, each a multiple of 128 except possibly the tail)."""
    if d <= 512:
        return d
    return min(d, max(512, _round_up(pl.cdiv(d, _MAX_FUSED_CHUNKS), 128)))


def _choose_tiles_2d(c, d, dtype, n_bufs):
    """(c_tile, col_tile) for the column-tiled two-pass kernels.  Blocks are
    budgeted at ~_TARGET_TILE_BYTES of f32 (kernels promote to f32)."""
    pack = _sublane_pack(dtype)
    budget, _ = _vmem_budgets()
    blk_bytes = min(_TARGET_TILE_BYTES, max(pack * 128 * 4, budget // (2 * n_bufs)))
    if d <= 128:
        col_tile = d                      # full last dim: no 128 constraint
    else:
        col_tile = min((d // 128) * 128, _MAX_LANES)
    max_rows = max(1, blk_bytes // (col_tile * 4))
    if c <= max_rows:
        c_tile = c if c < 2 * pack else min(c, _round_up(pl.cdiv(c, 2), pack))
    else:
        c_tile = max(pack, (max_rows // pack) * pack)
    return c_tile, col_tile


# ----------------------------- kernels ----------------------------------------


def _fused_quant_kernel(x_ref, o_ref, delta_ref, zp_ref, *, n_levels, chunk):
    """Fused per-channel min/max -> (delta, zp) -> fake-quant on one
    (c_tile, D) block, streamed over static `chunk`-lane slices so live f32
    intermediates stay bounded (x: 1 HBM read, 2 cheap VMEM re-reads).
    Channel rows are independent, so ragged channel blocks are safe (padded
    rows are never written back)."""
    c_tile, d = x_ref.shape
    qmax = float(n_levels - 1)
    starts = list(range(0, d, chunk))

    # phase 1: running per-channel min / max (per-chunk XLU reduce is hidden
    # under the HBM-bound DMA; running state is only (c_tile, 1) each)
    x_min = None
    x_max = None
    for s in starts:
        xb = x_ref[:, s:min(s + chunk, d)].astype(jnp.float32)
        mn = jnp.min(xb, axis=1, keepdims=True)
        mx = jnp.max(xb, axis=1, keepdims=True)
        x_min = mn if x_min is None else jnp.minimum(x_min, mn)
        x_max = mx if x_max is None else jnp.maximum(x_max, mx)
    x_min = jnp.minimum(x_min, 0.0)
    x_max = jnp.maximum(x_max, 0.0)

    delta = jnp.maximum((x_max - x_min) / qmax, 1e-8)
    zp = jnp.round(-x_min / delta)            # O(C) exact divide
    inv_delta = 1.0 / delta                   # O(C) exact divide
    lo = -zp                                  # zero-point folded into the
    hi = qmax - zp                            # clip bounds (2 fewer ops/elem)
    delta_ref[...] = delta
    zp_ref[...] = zp

    # phase 2: fake-quant, streamed chunk-by-chunk straight into o_ref
    for s in starts:
        e = min(s + chunk, d)
        xb = x_ref[:, s:e].astype(jnp.float32)
        q = jnp.clip(jnp.round(xb * inv_delta), lo, hi)
        o_ref[:, s:e] = (q * delta).astype(o_ref.dtype)


def _minmax_scale_kernel(x_ref, delta_ref, zp_ref, min_sc, max_sc,
                         *, n_levels, d_valid, col_tile, n_col_blocks):
    """Two-pass fallback, pass 1: running per-channel min/max over column
    tiles; delta / zero_point finalized on the last column step.  The
    ragged-lane mask is only paid on the last column block."""
    j = pl.program_id(1)                       # reduction axis (innermost)
    last = n_col_blocks - 1
    w = min_sc.shape[1]                        # min(col_tile, 128)
    n_sub = col_tile // w

    @pl.when(j == 0)
    def _():
        min_sc[...] = jnp.full_like(min_sc, jnp.inf)
        max_sc[...] = jnp.full_like(max_sc, -jnp.inf)

    def accumulate(base_col):
        """base_col: static absolute column of this block's first lane when
        masking may be needed, or None when the block is fully in range."""
        mn = min_sc[...]
        mx = max_sc[...]
        for t in range(n_sub):
            lo = t * w
            if base_col is not None and base_col + lo >= d_valid:
                continue                       # sub-chunk entirely in padding
            xb = x_ref[:, lo:lo + w].astype(jnp.float32)
            if base_col is not None and base_col + lo + w > d_valid:
                lane = base_col + lo + lax.broadcasted_iota(jnp.int32, xb.shape, 1)
                valid = lane < d_valid
                mn = jnp.minimum(mn, jnp.where(valid, xb, jnp.inf))
                mx = jnp.maximum(mx, jnp.where(valid, xb, -jnp.inf))
            else:
                mn = jnp.minimum(mn, xb)
                mx = jnp.maximum(mx, xb)
        min_sc[...] = mn
        max_sc[...] = mx

    if d_valid % col_tile != 0:                # ragged last column block
        @pl.when(j != last)
        def _():
            accumulate(None)

        @pl.when(j == last)
        def _():
            accumulate(last * col_tile)
    else:
        accumulate(None)

    @pl.when(j == last)
    def _():
        x_min = jnp.minimum(jnp.min(min_sc[...], axis=1, keepdims=True), 0.0)
        x_max = jnp.maximum(jnp.max(max_sc[...], axis=1, keepdims=True), 0.0)
        delta = jnp.maximum((x_max - x_min) / float(n_levels - 1), 1e-8)
        delta_ref[...] = delta
        zp_ref[...] = jnp.round(-x_min / delta)


def _fake_quant_kernel(x_ref, delta_ref, zp_ref, o_ref, *, n_levels):
    """Elementwise fake-quant with per-channel float32 (c_tile, 1) delta/zp;
    zero-point folded into the clip bounds."""
    x = x_ref[...].astype(jnp.float32)
    delta = delta_ref[...]
    zp = zp_ref[...]
    inv_delta = 1.0 / delta                    # exact, O(C)
    lo = -zp
    hi = float(n_levels - 1) - zp
    q = jnp.clip(jnp.round(x * inv_delta), lo, hi)
    o_ref[...] = (q * delta).astype(o_ref.dtype)


# ----------------------------- wrappers ----------------------------------------


def fused_init_fake_quant(x_flat, n_levels=N_LEVELS, c_tile=None):
    """One-pass init + fake-quant: x is read from HBM once and written once.
    Returns (quantized x, delta (C,1) f32, zero_point (C,1) f32)."""
    c, d = x_flat.shape
    if c_tile is None:
        c_tile = _fused_c_tile(c, d, x_flat.dtype)
    assert c_tile is not None, "fused path does not fit VMEM; use two-pass path"
    chunk = _fused_chunk(d)
    grid = (pl.cdiv(c, c_tile),)
    out, delta, zp = pl.pallas_call(
        functools.partial(_fused_quant_kernel, n_levels=n_levels, chunk=chunk),
        out_shape=(jax.ShapeDtypeStruct((c, d), x_flat.dtype),
                   jax.ShapeDtypeStruct((c, 1), jnp.float32),
                   jax.ShapeDtypeStruct((c, 1), jnp.float32)),
        grid_spec=pltpu.PrefetchScalarGridSpec(
            num_scalar_prefetch=0,
            grid=grid,
            in_specs=[pl.BlockSpec((c_tile, d), lambda i: (i, 0))],
            out_specs=[pl.BlockSpec((c_tile, d), lambda i: (i, 0)),
                       pl.BlockSpec((c_tile, 1), lambda i: (i, 0)),
                       pl.BlockSpec((c_tile, 1), lambda i: (i, 0))]),
        compiler_params=_compiler_params(("parallel",)),
    )(x_flat)
    return out, delta, zp


def init_quantization_scale(x_flat, n_levels=N_LEVELS, c_tile=None,
                            col_tile=None):
    """Two-pass fallback, pass 1: per-channel (dim 0) delta / zero_point."""
    c, d = x_flat.shape
    auto_c, auto_col = _choose_tiles_2d(c, d, x_flat.dtype, n_bufs=1)
    c_tile = auto_c if c_tile is None else c_tile
    col_tile = auto_col if col_tile is None else col_tile
    assert col_tile <= 128 or col_tile % 128 == 0, "col_tile must be lane-aligned"
    n_col_blocks = pl.cdiv(d, col_tile)
    grid = (pl.cdiv(c, c_tile), n_col_blocks)
    w = min(col_tile, 128)
    delta, zp = pl.pallas_call(
        functools.partial(_minmax_scale_kernel, n_levels=n_levels, d_valid=d,
                          col_tile=col_tile, n_col_blocks=n_col_blocks),
        out_shape=(jax.ShapeDtypeStruct((c, 1), jnp.float32),
                   jax.ShapeDtypeStruct((c, 1), jnp.float32)),
        grid_spec=pltpu.PrefetchScalarGridSpec(
            num_scalar_prefetch=0,
            grid=grid,
            in_specs=[pl.BlockSpec((c_tile, col_tile), lambda i, j: (i, j))],
            out_specs=[pl.BlockSpec((c_tile, 1), lambda i, j: (i, 0)),
                       pl.BlockSpec((c_tile, 1), lambda i, j: (i, 0))],
            scratch_shapes=[pltpu.VMEM((c_tile, w), jnp.float32),
                            pltpu.VMEM((c_tile, w), jnp.float32)]),
        compiler_params=_compiler_params(("parallel", "arbitrary")),
    )(x_flat)
    return delta, zp


def fake_quantize(x_flat, delta, zp, n_levels=N_LEVELS, c_tile=None,
                  col_tile=None):
    """Elementwise fake-quant with per-channel (C, 1) float32 delta / zp."""
    c, d = x_flat.shape
    auto_c, auto_col = _choose_tiles_2d(c, d, x_flat.dtype, n_bufs=2)
    c_tile = auto_c if c_tile is None else c_tile
    col_tile = auto_col if col_tile is None else col_tile
    grid = (pl.cdiv(c, c_tile), pl.cdiv(d, col_tile))
    return pl.pallas_call(
        functools.partial(_fake_quant_kernel, n_levels=n_levels),
        out_shape=jax.ShapeDtypeStruct((c, d), x_flat.dtype),
        grid_spec=pltpu.PrefetchScalarGridSpec(
            num_scalar_prefetch=0,
            grid=grid,
            in_specs=[pl.BlockSpec((c_tile, col_tile), lambda i, j: (i, j)),
                      pl.BlockSpec((c_tile, 1), lambda i, j: (i, 0)),
                      pl.BlockSpec((c_tile, 1), lambda i, j: (i, 0))],
            out_specs=pl.BlockSpec((c_tile, col_tile), lambda i, j: (i, j))),
        compiler_params=_compiler_params(("parallel", "parallel")),
    )(x_flat, delta.astype(jnp.float32), zp.astype(jnp.float32))


class UniformAffineQuantizer:
    """JAX/Pallas port of the PyTorch UniformAffineQuantizer forward pass
    (default config: n_bits=8, asymmetric, channel_wise=True, 'max')."""

    def __init__(self, n_bits=8, symmetric=False, channel_wise=True,
                 scale_method='max', leaf_param=False):
        assert not symmetric and channel_wise and scale_method == 'max', \
            "this port implements the default config (channel_wise 'max')"
        self.n_bits = n_bits
        self.n_levels = 2 ** n_bits
        self.delta = None
        self.zero_point = None
        self.inited = False

    def __call__(self, x):
        orig_shape = x.shape
        c = orig_shape[0]
        x_flat = x.reshape(c, -1)
        bshape = (c,) + (1,) * (len(orig_shape) - 1)

        if not self.inited:
            d = x_flat.shape[1]
            c_tile = _fused_c_tile(c, d, x_flat.dtype)
            if c_tile is not None:
                # single fused pass: x read once, written once
                out_flat, delta, zp = fused_init_fake_quant(
                    x_flat, self.n_levels, c_tile)
            else:
                # D too large to keep even a pack-row slab resident: two passes
                delta, zp = init_quantization_scale(x_flat, self.n_levels)
                out_flat = fake_quantize(x_flat, delta, zp, self.n_levels)
            self.delta = delta.reshape(bshape)          # float32, like PyTorch
            self.zero_point = zp.reshape(bshape)
            self.inited = True
            return out_flat.reshape(orig_shape)

        out = fake_quantize(x_flat, self.delta.reshape(c, 1),
                            self.zero_point.reshape(c, 1), self.n_levels)
        return out.reshape(orig_shape)


# ----------------------------- main --------------------------------------------


def _reference(x_flat):
    """Pure-JAX reference mirroring the kernel math (exact 1/delta, multiply,
    zero-point-folded clip is algebraically identical to +zp/clip/-zp)."""
    xf = x_flat.astype(jnp.float32)
    x_min = jnp.minimum(xf.min(axis=1, keepdims=True), 0.0)
    x_max = jnp.maximum(xf.max(axis=1, keepdims=True), 0.0)
    delta = jnp.maximum((x_max - x_min) / (N_LEVELS - 1), 1e-8)
    zp = jnp.round(-x_min / delta)
    q = jnp.clip(jnp.round(xf * (1.0 / delta)) + zp, 0, N_LEVELS - 1)
    return (q - zp) * delta, delta, zp


if __name__ == "__main__":
    key = jax.random.PRNGKey(0)
    k1, k2, k3 = jax.random.split(key, 3)

    # NCHW-style 4D tensor; dim 0 is the channel-wise quantization axis.
    x = jax.random.normal(k1, (2, 4, 16, 16), dtype=jnp.float32) * 3.0

    quantizer = UniformAffineQuantizer(n_bits=8, symmetric=False,
                                       channel_wise=True, scale_method='max')
    out1 = jax.block_until_ready(quantizer(x))   # fused init + fake-quant path
    out2 = jax.block_until_ready(quantizer(x))   # fake-quant-only path

    xf = x.reshape(x.shape[0], -1)
    ref, delta_r, zp_r = _reference(xf)
    ref = ref.reshape(x.shape)
    # strict PyTorch formula (per-element divide); may differ by <= 1 LSB
    xq_div = jnp.clip(jnp.round(xf / delta_r) + zp_r, 0, N_LEVELS - 1)
    ref_div = ((xq_div - zp_r) * delta_r).reshape(x.shape)

    assert jnp.allclose(out1, ref, atol=1e-5, rtol=1e-5), "fused path mismatch"
    assert jnp.allclose(out2, ref, atol=1e-5, rtol=1e-5), "fq path mismatch"
    assert float(jnp.max(jnp.abs(out1 - ref_div))) <= \
        float(jnp.max(delta_r)) * 1.0001 + 1e-6, "more than 1 LSB off"
    assert jnp.allclose(quantizer.delta.reshape(-1, 1), delta_r,
                        atol=1e-8, rtol=1e-6), "delta mismatch"
    assert jnp.allclose(quantizer.zero_point.reshape(-1, 1), zp_r), \
        "zero_point mismatch"

    # fused path with a ragged last channel block (C=10, forced c_tile=8)
    x2 = jax.random.normal(k2, (10, 3, 7, 5), dtype=jnp.float32) * 2.0
    x2f = x2.reshape(10, -1)
    o2, d2, z2 = fused_init_fake_quant(x2f, N_LEVELS, c_tile=8)
    o2 = jax.block_until_ready(o2)
    r2, dr2, zr2 = _reference(x2f)
    assert jnp.allclose(o2, r2, atol=1e-5, rtol=1e-5), "ragged-C fused mismatch"
    assert jnp.allclose(d2, dr2, atol=1e-8, rtol=1e-6), "ragged-C delta mismatch"
    assert jnp.allclose(z2, zr2), "ragged-C zero_point mismatch"

    # two-pass fallback kernels: multi-column-block + ragged last lane block
    x3 = jax.random.normal(k3, (4, 2, 250), dtype=jnp.float32) * 1.5
    x3f = x3.reshape(4, -1)                                  # (4, 500)
    d3, z3 = init_quantization_scale(x3f, N_LEVELS, col_tile=128)
    o3 = jax.block_until_ready(fake_quantize(x3f, d3, z3, N_LEVELS,
                                             col_tile=128))
    r3, dr3, zr3 = _reference(x3f)
    assert jnp.allclose(d3, dr3, atol=1e-8, rtol=1e-6), "2pass delta mismatch"
    assert jnp.allclose(z3, zr3), "2pass zero_point mismatch"
    assert jnp.allclose(o3, r3, atol=1e-5, rtol=1e-5), "2pass output mismatch"

    # two-pass on the main tensor with an exact column split (j > 1, no mask)
    d4, z4 = init_quantization_scale(xf, N_LEVELS, c_tile=2, col_tile=256)
    o4 = jax.block_until_ready(fake_quantize(xf, d4, z4, N_LEVELS,
                                             c_tile=2, col_tile=256))
    assert jnp.allclose(d4, delta_r, atol=1e-8, rtol=1e-6), "2pass delta (exact)"
    assert jnp.allclose(z4, zp_r), "2pass zero_point (exact)"
    assert jnp.allclose(o4.reshape(x.shape), ref, atol=1e-5, rtol=1e-5), \
        "2pass output (exact split) mismatch"

    print("KERNEL_OK")
</pallas_src>

<mosaic_0001>
module attributes {stable_mosaic.version = 11 : i64} {
  func.func @_fused_quant_kernel(%arg0: i32, %arg1: memref<2x1024xf32, #tpu.memory_space<vmem>>, %arg2: memref<2x1024xf32, #tpu.memory_space<vmem>>, %arg3: memref<2x1xf32, #tpu.memory_space<vmem>>, %arg4: memref<2x1xf32, #tpu.memory_space<vmem>>) attributes {dimension_semantics = [#tpu.dimension_semantics<parallel>], iteration_bounds = array<i64: 1>, scalar_prefetch = 0 : i64, scratch_operands = 0 : i64, tpu.core_type = #tpu.core_type<tc>, window_params = [{transform_indices = @transform_0, window_bounds = array<i64: 2, 1024>}, {transform_indices = @transform_1, window_bounds = array<i64: 2, 1024>}, {transform_indices = @transform_2, window_bounds = array<i64: 2, 1>}, {transform_indices = @transform_3, window_bounds = array<i64: 2, 1>}]} {
    %c0 = arith.constant 0 : index
    %c0_0 = arith.constant 0 : index
    %0 = vector.load %arg1[%c0, %c0_0] : memref<2x1024xf32, #tpu.memory_space<vmem>>, vector<2x512xf32>
    %cst = arith.constant dense<0x7F800000> : vector<2xf32>
    %1 = vector.multi_reduction <minimumf>, %0, %cst [1] : vector<2x512xf32> to vector<2xf32>
    %2 = vector.shape_cast %1 : vector<2xf32> to vector<2x1xf32>
    %cst_1 = arith.constant dense<0xFF800000> : vector<2xf32>
    %3 = vector.multi_reduction <maximumf>, %0, %cst_1 [1] : vector<2x512xf32> to vector<2xf32>
    %4 = vector.shape_cast %3 : vector<2xf32> to vector<2x1xf32>
    %c0_2 = arith.constant 0 : index
    %c512 = arith.constant 512 : index
    %5 = vector.load %arg1[%c0_2, %c512] : memref<2x1024xf32, #tpu.memory_space<vmem>>, vector<2x512xf32>
    %cst_3 = arith.constant dense<0x7F800000> : vector<2xf32>
    %6 = vector.multi_reduction <minimumf>, %5, %cst_3 [1] : vector<2x512xf32> to vector<2xf32>
    %7 = vector.shape_cast %6 : vector<2xf32> to vector<2x1xf32>
    %cst_4 = arith.constant dense<0xFF800000> : vector<2xf32>
    %8 = vector.multi_reduction <maximumf>, %5, %cst_4 [1] : vector<2x512xf32> to vector<2xf32>
    %9 = vector.shape_cast %8 : vector<2xf32> to vector<2x1xf32>
    %10 = arith.minimumf %2, %7 : vector<2x1xf32>
    %11 = arith.maximumf %4, %9 : vector<2x1xf32>
    %cst_5 = arith.constant 0.000000e+00 : f32
    %12 = vector.broadcast %cst_5 : f32 to vector<2x1xf32>
    %13 = arith.minimumf %10, %12 : vector<2x1xf32>
    %cst_6 = arith.constant 0.000000e+00 : f32
    %14 = vector.broadcast %cst_6 : f32 to vector<2x1xf32>
    %15 = arith.maximumf %11, %14 : vector<2x1xf32>
    %16 = arith.subf %15, %13 : vector<2x1xf32>
    %cst_7 = arith.constant 2.550000e+02 : f32
    %17 = vector.broadcast %cst_7 : f32 to vector<2x1xf32>
    %18 = arith.divf %16, %17 : vector<2x1xf32>
    %cst_8 = arith.constant 9.99999993E-9 : f32
    %19 = vector.broadcast %cst_8 : f32 to vector<2x1xf32>
    %20 = arith.maximumf %18, %19 : vector<2x1xf32>
    %cst_9 = arith.constant 0.000000e+00 : f32
    %21 = vector.broadcast %cst_9 : f32 to vector<2x1xf32>
    %22 = arith.subf %21, %13 : vector<2x1xf32>
    %23 = arith.divf %22, %20 : vector<2x1xf32>
    %24 = math.roundeven %23 : vector<2x1xf32>
    %cst_10 = arith.constant 1.000000e+00 : f32
    %25 = vector.broadcast %cst_10 : f32 to vector<2x1xf32>
    %26 = arith.divf %25, %20 : vector<2x1xf32>
    %cst_11 = arith.constant 0.000000e+00 : f32
    %27 = vector.broadcast %cst_11 : f32 to vector<2x1xf32>
    %28 = arith.subf %27, %24 : vector<2x1xf32>
    %cst_12 = arith.constant 2.550000e+02 : f32
    %29 = vector.broadcast %cst_12 : f32 to vector<2x1xf32>
    %30 = arith.subf %29, %24 : vector<2x1xf32>
    %c0_13 = arith.constant 0 : index
    %c0_14 = arith.constant 0 : index
    %31 = vector.load %arg3[%c0_13, %c0_14] : memref<2x1xf32, #tpu.memory_space<vmem>>, vector<2x1xf32>
    tpu.vector_store %arg3[%c0_13, %c0_14], %20 {strides = array<i32>} : memref<2x1xf32, #tpu.memory_space<vmem>>, vector<2x1xf32>,
    %c0_15 = arith.constant 0 : index
    %c0_16 = arith.constant 0 : index
    %32 = vector.load %arg4[%c0_15, %c0_16] : memref<2x1xf32, #tpu.memory_space<vmem>>, vector<2x1xf32>
    tpu.vector_store %arg4[%c0_15, %c0_16], %24 {strides = array<i32>} : memref<2x1xf32, #tpu.memory_space<vmem>>, vector<2x1xf32>,
    %c0_17 = arith.constant 0 : index
    %c0_18 = arith.constant 0 : index
    %33 = vector.load %arg1[%c0_17, %c0_18] : memref<2x1024xf32, #tpu.memory_space<vmem>>, vector<2x512xf32>
    %34 = vector.broadcast %26 : vector<2x1xf32> to vector<2x512xf32>
    %35 = arith.mulf %33, %34 : vector<2x512xf32>
    %36 = math.roundeven %35 : vector<2x512xf32>
    %37 = vector.broadcast %28 : vector<2x1xf32> to vector<2x512xf32>
    %38 = arith.maximumf %37, %36 : vector<2x512xf32>
    %39 = vector.broadcast %30 : vector<2x1xf32> to vector<2x512xf32>
    %40 = arith.minimumf %39, %38 : vector<2x512xf32>
    %41 = vector.broadcast %20 : vector<2x1xf32> to vector<2x512xf32>
    %42 = arith.mulf %40, %41 : vector<2x512xf32>
    %c0_19 = arith.constant 0 : index
    %c0_20 = arith.constant 0 : index
    %43 = vector.load %arg2[%c0_19, %c0_20] : memref<2x1024xf32, #tpu.memory_space<vmem>>, vector<2x512xf32>
    tpu.vector_store %arg2[%c0_19, %c0_20], %42 {strides = array<i32>} : memref<2x1024xf32, #tpu.memory_space<vmem>>, vector<2x512xf32>,
    %c0_21 = arith.constant 0 : index
    %c512_22 = arith.constant 512 : index
    %44 = vector.load %arg1[%c0_21, %c512_22] : memref<2x1024xf32, #tpu.memory_space<vmem>>, vector<2x512xf32>
    %45 = vector.broadcast %26 : vector<2x1xf32> to vector<2x512xf32>
    %46 = arith.mulf %44, %45 : vector<2x512xf32>
    %47 = math.roundeven %46 : vector<2x512xf32>
    %48 = vector.broadcast %28 : vector<2x1xf32> to vector<2x512xf32>
    %49 = arith.maximumf %48, %47 : vector<2x512xf32>
    %50 = vector.broadcast %30 : vector<2x1xf32> to vector<2x512xf32>
    %51 = arith.minimumf %50, %49 : vector<2x512xf32>
    %52 = vector.broadcast %20 : vector<2x1xf32> to vector<2x512xf32>
    %53 = arith.mulf %51, %52 : vector<2x512xf32>
    %c0_23 = arith.constant 0 : index
    %c512_24 = arith.constant 512 : index
    %54 = vector.load %arg2[%c0_23, %c512_24] : memref<2x1024xf32, #tpu.memory_space<vmem>>, vector<2x512xf32>
    tpu.vector_store %arg2[%c0_23, %c512_24], %53 {strides = array<i32>} : memref<2x1024xf32, #tpu.memory_space<vmem>>, vector<2x512xf32>,
    return
  }
  func.func @transform_0(%arg0: i32) -> (i32, i32) {
    %c0_i32 = arith.constant 0 : i32
    %c0_i32_0 = arith.constant 0 : i32
    return %arg0, %c0_i32 : i32, i32
  }
  func.func @transform_1(%arg0: i32) -> (i32, i32) {
    %c0_i32 = arith.constant 0 : i32
    %c0_i32_0 = arith.constant 0 : i32
    return %arg0, %c0_i32 : i32, i32
  }
  func.func @transform_2(%arg0: i32) -> (i32, i32) {
    %c0_i32 = arith.constant 0 : i32
    %c0_i32_0 = arith.constant 0 : i32
    return %arg0, %c0_i32 : i32, i32
  }
  func.func @transform_3(%arg0: i32) -> (i32, i32) {
    %c0_i32 = arith.constant 0 : i32
    %c0_i32_0 = arith.constant 0 : i32
    return %arg0, %c0_i32 : i32, i32
  }
}

</mosaic_0001>

<llo_original>
// kernel: tpu_custom_call.1
$region0: #{tpu_custom_call.1}
  #allocation0 [shape = 'u32[]', space=smem, size = 0x4, offset = 0x4, fixed_abs, tag = 'smem constant byte address 0x4 - core index']
  #allocation1 [shape = 'u32[144,128]{1,0:T(1,128)}', space=vmem, size = 0x12000, scoped, tag = 'internal scratch']
  %s0 = inlined_call_operand.hbm [shape: f32[2,1024], index: 0, kind: input, shape index: {}]
  %s1 = inlined_call_operand.hbm [shape: f32[2,1024], index: 1, kind: output, shape index: {0}]
  %s2 = inlined_call_operand.vmem [shape: f32[2,1], index: 2, kind: output, shape index: {1}]
  %s3 = inlined_call_operand.vmem [shape: f32[2,1], index: 3, kind: output, shape index: {2}]
  %4 = xla_tuple %s1, %s2, %s3
  %s5 = sld [smem:[#allocation0]]
  $region34: #{tpu_custom_call.1} parent=0
    _
  %s7 = ssub.s32 1, %s5
  %s8 = scalar_select 0, %s7, %s5
  $region1: #{tpu_custom_call.1} parent=0
    #allocation2 [shape = 'u8[8192]{0}', space=vmem, size = 0x2000, scoped, tag = 'input window, operand 0, single buffered']
    #allocation3 [shape = 's32[1]{0}', space=sflag, size = 0x4, scoped, tag = 'scoped memory for tpu_custom_call.1']
    #allocation4 [shape = 's32[1]{0}', space=sflag, size = 0x4, scoped, tag = 'scoped memory for tpu_custom_call.1']
    #allocation5 [shape = 'u8[8192]{0}', space=vmem, size = 0x2000, scoped, tag = 'output window, operand 0, single buffered']
    %9 = vsyncpa [#allocation3], 0
    %10 = vsyncpa [#allocation4], 0
    // Predicated region
    $region2: #{tpu_custom_call.1} parent=1 // pred_check
      _
    $region3: #{tpu_custom_call.1} parent=1 // pred_check_branch
      %12 = sbr.rel (0) target = $region5
    $region4: #{tpu_custom_call.1} parent=1 // pred_region
      %s14 = ssub.s32 256, 256
      %15 = vsyncadd [#allocation3], %s14
      %s17 = sshll.u32 [#allocation2], 4
      %s18 = int_to_ptr.vmem [resolvable:$true] %s17
      %20 = dma.hbm_to_vmem [thread:$0]  %s0, 256, %s18, [#allocation3]
    $region5: #{tpu_custom_call.1} parent=1 // pred_fallthru
      _
    // Predicated region
    $region6: #{tpu_custom_call.1} parent=1 // pred_check
      _
    $region7: #{tpu_custom_call.1} parent=1 // pred_check_branch
      %22 = sbr.rel (0) target = $region9
    $region8: #{tpu_custom_call.1} parent=1 // pred_region
      %23 = dma.done [#allocation3], 256
    $region9: #{tpu_custom_call.1} parent=1 // pred_fallthru
      _
    %v24 = vld [vmem:[#allocation2] sm:$0xff]
    %v26 = vcombine.high %v24, %v24
    %v28 = vunpack.c.l.s4 1983009808
    %v29 = vunpack.c.0.s8 %v28
    %v30 = vlaneseq
    %v31 = vshrl.u32 %v30, 7
    %v32 = vsub.s32 %v29, %v31
    %v33 = vrot.slane %v24, %v32
    %v35 = vunpack.c.l.s4 1983009808
    %v36 = vunpack.c.0.s8 %v35
    %v37 = vlaneseq
    %v38 = vshrl.u32 %v37, 7
    %v39 = vsub.s32 %v36, %v38
    %v40 = vrot.slane %v26, %v39
    %v41 = vcombine.high %v33, %v33
    %v42 = vcombine.high %v40, %v40
    %vm47 = vcmask 1041408
    %v48 = vsel %vm47, %v33, inf
    %v49 = vsel %vm47, %v41, inf
    %v50 = vsel %vm47, %v40, inf
    %v51 = vsel %vm47, %v42, inf
    %v52 = vmin.f32 %v48, %v49
    %v53 = vmin.f32 %v50, %v51
    %v54 = vmin.f32 %v52, %v53
    %55 = vmin.xlane.f32.xlu0 %v54
    %v56 = vpop.xlane.xlu0 %55
    %v57 = vsel %vm47, %v33, -inf
    %v58 = vsel %vm47, %v41, -inf
    %v59 = vsel %vm47, %v40, -inf
    %v60 = vsel %vm47, %v42, -inf
    %v61 = vmax.f32 %v57, %v58
    %v62 = vmax.f32 %v59, %v60
    %v63 = vmax.f32 %v61, %v62
    %64 = vmax.xlane.f32.xlu0 %v63
    %v65 = vpop.xlane.xlu0 %64
    %v66 = vld [vmem:[#allocation2 + $0x8] sm:$0xff]
    %v68 = vcombine.high %v66, %v66
    %v70 = vunpack.c.l.s4 1983009808
    %v71 = vunpack.c.0.s8 %v70
    %v72 = vlaneseq
    %v73 = vshrl.u32 %v72, 7
    %v74 = vsub.s32 %v71, %v73
    %v75 = vrot.slane %v66, %v74
    %v77 = vunpack.c.l.s4 1983009808
    %v78 = vunpack.c.0.s8 %v77
    %v79 = vlaneseq
    %v80 = vshrl.u32 %v79, 7
    %v81 = vsub.s32 %v78, %v80
    %v82 = vrot.slane %v68, %v81
    %v83 = vcombine.high %v75, %v75
    %v84 = vcombine.high %v82, %v82
    %v89 = vsel %vm47, %v75, inf
    %v90 = vsel %vm47, %v83, inf
    %v91 = vsel %vm47, %v82, inf
    %v92 = vsel %vm47, %v84, inf
    %v93 = vmin.f32 %v89, %v90
    %v94 = vmin.f32 %v91, %v92
    %v95 = vmin.f32 %v93, %v94
    %96 = vmin.xlane.f32.xlu0 %v95
    %v97 = vpop.xlane.xlu0 %96
    %v98 = vsel %vm47, %v75, -inf
    %v99 = vsel %vm47, %v83, -inf
    %v100 = vsel %vm47, %v82, -inf
    %v101 = vsel %vm47, %v84, -inf
    %v102 = vmax.f32 %v98, %v99
    %v103 = vmax.f32 %v100, %v101
    %v104 = vmax.f32 %v102, %v103
    %105 = vmax.xlane.f32.xlu0 %v104
    %v106 = vpop.xlane.xlu0 %105
    %v107 = vmin.f32 %v56, %v97
    %v108 = vmax.f32 %v65, %v106
    %v109 = vmin.f32 %v107, 0.0
    %v110 = vmax.f32 %v108, 0.0
    %v111 = vsub.f32 %v110, %v109
    %v112 = vrcp.pop 255.0
    %v113 = vmul.f32 %v111, %v112
    %v114 = vmax.f32 %v113, 1e-08
    %v115 = vsub.f32 0.0, %v109
    %v116 = vrcp.pop %v114
    %v117 = vmul.f32 %v115, %v116
    %v118 = vround.ne.pseudo %v117
    %v119 = vmul.f32 1.0, %v116
    %v120 = vsub.f32 0.0, %v118
    %v121 = vsub.f32 255.0, %v118
    %vm122 = vcmask 1024
    %123 = vst.msk [vmem:[%s2] sm:$0x3] %vm122, %v114
    %124 = vst.msk [vmem:[%s3] sm:$0x3] %vm122, %v118
    %v125 = vld [vmem:[#allocation2] sm:$0xff]
    %v128 = vunpack.c.l.s4 269488144
    %v129 = vunpack.c.0.s8 %v128
    %v130 = vlaneseq
    %v131 = vshrl.u32 %v130, 7
    %v132 = vsub.s32 %v129, %v131
    %v133 = vrot.slane %v119, %v132
    %v135 = vmul.f32 %v125, %v133
    %v136 = vround.ne.pseudo %v135
    %v138 = vcombine.high %v136, %v136
    %v140 = vunpack.c.l.s4 1983009808
    %v141 = vunpack.c.0.s8 %v140
    %v142 = vlaneseq
    %v143 = vshrl.u32 %v142, 7
    %v144 = vsub.s32 %v141, %v143
    %v145 = vrot.slane %v136, %v144
    %v147 = vunpack.c.l.s4 1983009808
    %v148 = vunpack.c.0.s8 %v147
    %v149 = vlaneseq
    %v150 = vshrl.u32 %v149, 7
    %v151 = vsub.s32 %v148, %v150
    %v152 = vrot.slane %v138, %v151
    %v153 = vcombine.high %v145, %v145
    %v154 = vcombine.high %v152, %v152
    %v159 = vmax.f32 %v120, %v145
    %v160 = vmax.f32 %v120, %v153
    %v161 = vmax.f32 %v120, %v152
    %v162 = vmax.f32 %v120, %v154
    %v163 = vmin.f32 %v121, %v159
    %v164 = vmin.f32 %v121, %v160
    %v165 = vmin.f32 %v121, %v161
    %v166 = vmin.f32 %v121, %v162
    %v167 = vmul.f32 %v163, %v114
    %v168 = vmul.f32 %v164, %v114
    %v169 = vmul.f32 %v165, %v114
    %v170 = vmul.f32 %v166, %v114
    %v175 = vcombine.low %v167, %v168
    %v176 = vcombine.low %v169, %v170
    %v178 = vunpack.c.l.s4 1983009808
    %v179 = vunpack.c.0.s8 %v178
    %v180 = vlaneseq
    %v181 = vshrl.u32 %v180, 7
    %v182 = vsub.s32 %v179, %v181
    %v183 = vrot.slane %v175, %v182
    %v185 = vunpack.c.l.s4 1983009808
    %v186 = vunpack.c.0.s8 %v185
    %v187 = vlaneseq
    %v188 = vshrl.u32 %v187, 7
    %v189 = vsub.s32 %v186, %v188
    %v190 = vrot.slane %v176, %v189
    %v191 = vcombine.low %v183, %v190
    %193 = vst [vmem:[#allocation5] sm:$0xff] %v191
    %v194 = vld [vmem:[#allocation2 + $0x8] sm:$0xff]
    %v195 = vmul.f32 %v194, %v133
    %v196 = vround.ne.pseudo %v195
    %v198 = vcombine.high %v196, %v196
    %v200 = vunpack.c.l.s4 1983009808
    %v201 = vunpack.c.0.s8 %v200
    %v202 = vlaneseq
    %v203 = vshrl.u32 %v202, 7
    %v204 = vsub.s32 %v201, %v203
    %v205 = vrot.slane %v196, %v204
    %v207 = vunpack.c.l.s4 1983009808
    %v208 = vunpack.c.0.s8 %v207
    %v209 = vlaneseq
    %v210 = vshrl.u32 %v209, 7
    %v211 = vsub.s32 %v208, %v210
    %v212 = vrot.slane %v198, %v211
    %v213 = vcombine.high %v205, %v205
    %v214 = vcombine.high %v212, %v212
    %v219 = vmax.f32 %v120, %v205
    %v220 = vmax.f32 %v120, %v213
    %v221 = vmax.f32 %v120, %v212
    %v222 = vmax.f32 %v120, %v214
    %v223 = vmin.f32 %v121, %v219
    %v224 = vmin.f32 %v121, %v220
    %v225 = vmin.f32 %v121, %v221
    %v226 = vmin.f32 %v121, %v222
    %v227 = vmul.f32 %v223, %v114
    %v228 = vmul.f32 %v224, %v114
    %v229 = vmul.f32 %v225, %v114
    %v230 = vmul.f32 %v226, %v114
    %v235 = vcombine.low %v227, %v228
    %v236 = vcombine.low %v229, %v230
    %v238 = vunpack.c.l.s4 1983009808
    %v239 = vunpack.c.0.s8 %v238
    %v240 = vlaneseq
    %v241 = vshrl.u32 %v240, 7
    %v242 = vsub.s32 %v239, %v241
    %v243 = vrot.slane %v235, %v242
    %v245 = vunpack.c.l.s4 1983009808
    %v246 = vunpack.c.0.s8 %v245
    %v247 = vlaneseq
    %v248 = vshrl.u32 %v247, 7
    %v249 = vsub.s32 %v246, %v248
    %v250 = vrot.slane %v236, %v249
    %v251 = vcombine.low %v243, %v250
    %253 = vst [vmem:[#allocation5 + $0x8] sm:$0xff] %v251
    // Predicated region
    $region10: #{tpu_custom_call.1} parent=1 // pred_check
      _
    $region11: #{tpu_custom_call.1} parent=1 // pred_check_branch
      %255 = sbr.rel (0) target = $region13
    $region12: #{tpu_custom_call.1} parent=1 // pred_region
      %s257 = ssub.s32 256, 256
      %258 = vsyncadd [#allocation4], %s257
      %s260 = sshll.u32 [#allocation5], 4
      %s261 = int_to_ptr.vmem [resolvable:$true] %s260
      %263 = dma.vmem_to_hbm [thread:$0]  %s261, 256, %s1, [#allocation4]
    $region13: #{tpu_custom_call.1} parent=1 // pred_fallthru
      _
    // Predicated region
    $region14: #{tpu_custom_call.1} parent=1 // pred_check
      _
    $region15: #{tpu_custom_call.1} parent=1 // pred_check_branch
      %265 = sbr.rel (0) target = $region17
    $region16: #{tpu_custom_call.1} parent=1 // pred_region
      _
    $region17: #{tpu_custom_call.1} parent=1 // pred_fallthru
      _
    // Predicated region
    $region18: #{tpu_custom_call.1} parent=1 // pred_check
      _
    $region19: #{tpu_custom_call.1} parent=1 // pred_check_branch
      %267 = sbr.rel (0) target = $region21
    $region20: #{tpu_custom_call.1} parent=1 // pred_region
      _
    $region21: #{tpu_custom_call.1} parent=1 // pred_fallthru
      _
    // Predicated region
    $region22: #{tpu_custom_call.1} parent=1 // pred_check
      _
    $region23: #{tpu_custom_call.1} parent=1 // pred_check_branch
      %269 = sbr.rel (0) target = $region25
    $region24: #{tpu_custom_call.1} parent=1 // pred_region
      %270 = dma.done [#allocation4], 256
    $region25: #{tpu_custom_call.1} parent=1 // pred_fallthru
      _
    // Predicated region
    $region26: #{tpu_custom_call.1} parent=1 // pred_check
      _
    $region27: #{tpu_custom_call.1} parent=1 // pred_check_branch
      %272 = sbr.rel (0) target = $region29
    $region28: #{tpu_custom_call.1} parent=1 // pred_region
      _
    $region29: #{tpu_custom_call.1} parent=1 // pred_fallthru
      _
    // Predicated region
    $region30: #{tpu_custom_call.1} parent=1 // pred_check
      _
    $region31: #{tpu_custom_call.1} parent=1 // pred_check_branch
      %274 = sbr.rel (0) target = $region33
    $region32: #{tpu_custom_call.1} parent=1 // pred_region
      _
    $region33: #{tpu_custom_call.1} parent=1 // pred_fallthru
      _
    %275 = vsyncpa [#allocation3], 1
    %276 = vsyncpa [#allocation4], 1

</llo_original>
